<compile_context>
chip_gen: v7x
topology: tpu7x:2x2x1
jax: 0.10.0
libtpu: 0.0.40
codegen_flags: <defaults>
</compile_context>

<pallas_src>
import functools

import jax
import jax.numpy as jnp
from jax.experimental import pallas as pl
from jax.experimental.pallas import tpu as pltpu

FPAD = 128           # lane-dense feature padding
TM_CORE = 256        # row tile for the projection / BN-apply kernels
STREAM_TILE = 512    # row / K tile for the streaming A @ X matmul


def _round_up(x, m):
    return (x + m - 1) // m * m


def _vmem_limit_bytes():
    # Generation-aware budget: ~48 MiB on v7x (64 MiB physical), ~96 MiB on
    # v5e/v6e (128 MiB physical).
    try:
        cap = int(pltpu.get_tpu_info().vmem_capacity_bytes)
    except Exception:
        cap = 64 * 1024 * 1024
    return max(32 * 1024 * 1024, (cap * 3) // 4)


_VMEM_LIMIT = _vmem_limit_bytes()


def _pad2(a, rows, cols):
    r, c = a.shape
    return jnp.pad(a, ((0, rows - r), (0, cols - c)))


def _pad_rows(s):
    """Global row padding: small graphs 32-aligned, large ones stream-tile aligned."""
    if s <= TM_CORE:
        return _round_up(s, 32)
    return _round_up(s, STREAM_TILE)


def _pick_tile(dim, tile, align):
    """Largest convenient tile <= `tile`; `dim` is padded up to a tile multiple."""
    if dim <= tile:
        return _round_up(dim, align)
    for t in (tile, tile // 2, tile // 4):
        if dim % t == 0:
            return t
    return tile


def _full_spec(shape):
    nd = len(shape)
    return pl.BlockSpec(shape, lambda *idx, _nd=nd: (0,) * _nd)


# ---------------------------------------------------------------------------
# Tiled streaming matmul:  out = A @ X   (A streamed in (tm, tk) int8 blocks,
# cast to bf16 in-kernel, X column-resident, f32 VMEM accumulator, bf16 out).
# Used for A-power hops when A does not fit VMEM and for the [P0;P1] @ feat_b.
# ---------------------------------------------------------------------------
def stream_matmul_kernel(a_ref, x_ref, o_ref, acc_ref):
    @pl.when(pl.program_id(1) == 0)
    def _():
        acc_ref[...] = jnp.zeros_like(acc_ref)

    a = a_ref[...].astype(jnp.bfloat16)          # int8 tile -> bf16 (hidden under DMA)
    acc_ref[...] += jnp.dot(a, x_ref[...], preferred_element_type=jnp.float32)

    @pl.when(pl.program_id(1) == pl.num_programs(1) - 1)
    def _():
        o_ref[...] = acc_ref[...].astype(o_ref.dtype)


def stream_matmul(a_i8, x_bf, *, tile=STREAM_TILE):
    """out[S, F] = a[S, K] @ x[K, F]; int8 a, bf16 x/out, f32 accumulation."""
    S, K = a_i8.shape
    _, F = x_bf.shape
    tm = _pick_tile(S, tile, 32)       # int8 sublane alignment
    tk = _pick_tile(K, tile, 128)      # lane alignment (also x sublane)
    Sp, Kp = _round_up(S, tm), _round_up(K, tk)
    if Sp != S or Kp != K:             # zero pad: mathematically free for A @ X
        a_i8 = jnp.pad(a_i8, ((0, Sp - S), (0, Kp - K)))
        x_bf = jnp.pad(x_bf, ((0, Kp - K), (0, 0)))
    out = pl.pallas_call(
        stream_matmul_kernel,
        out_shape=jax.ShapeDtypeStruct((Sp, F), jnp.bfloat16),
        grid=(Sp // tm, Kp // tk),
        in_specs=[pl.BlockSpec((tm, tk), lambda i, k: (i, k)),
                  pl.BlockSpec((tk, F), lambda i, k: (k, 0))],
        out_specs=pl.BlockSpec((tm, F), lambda i, k: (i, 0)),
        scratch_shapes=[pltpu.VMEM((tm, F), jnp.float32)],
        compiler_params=pltpu.CompilerParams(
            dimension_semantics=("parallel", "arbitrary"),
            vmem_limit_bytes=_VMEM_LIMIT),
    )(a_i8, x_bf)
    return out[:S] if Sp != S else out


# ---------------------------------------------------------------------------
# aggregate_radius: z_k = A^(2^k) @ feat_a for k = 0..radius-1.
# VMEM-resident A path (A read from HBM exactly once, all hops in one kernel)
# with a streamed fallback for graphs that do not fit.
# ---------------------------------------------------------------------------
def hops_resident_kernel(a_ref, x_ref, o_ref, *, radius):
    a = a_ref[...].astype(jnp.bfloat16)          # whole A resident in VMEM
    # TODO(synk): intermediate hops are re-cast to bf16; exact-integer range is
    # limited vs. the f32 PyTorch reference for very dense / large graphs.
    z = jnp.dot(a, x_ref[...], preferred_element_type=jnp.float32).astype(jnp.bfloat16)
    o_ref[0] = z
    for i in range(radius - 1):
        for _ in range(2 ** i):
            z = jnp.dot(a, z, preferred_element_type=jnp.float32).astype(jnp.bfloat16)
        o_ref[i + 1] = z


def aggregate_hops(A_i8, fa_bf, radius):
    """Returns (radius, S, FPAD) bf16 stack of hop aggregates."""
    S = A_i8.shape[0]
    resident_bytes = 3 * S * S + (radius + 3) * S * FPAD * 4   # int8 A + bf16 copy + bufs
    if resident_bytes <= _VMEM_LIMIT // 2:
        kernel = functools.partial(hops_resident_kernel, radius=radius)
        return pl.pallas_call(
            kernel,
            out_shape=jax.ShapeDtypeStruct((radius, S, FPAD), jnp.bfloat16),
            grid=(1,),
            in_specs=[_full_spec(A_i8.shape), _full_spec(fa_bf.shape)],
            out_specs=_full_spec((radius, S, FPAD)),
            compiler_params=pltpu.CompilerParams(
                dimension_semantics=("arbitrary",),
                vmem_limit_bytes=_VMEM_LIMIT),
        )(A_i8, fa_bf)
    # Large-graph fallback: stream A from HBM once per hop.
    z = stream_matmul(A_i8, fa_bf)
    z_list = [z]
    for i in range(radius - 1):
        for _ in range(2 ** i):
            z = stream_matmul(A_i8, z)
        z_list.append(z)
    return jnp.stack(z_list, axis=0)


# ---------------------------------------------------------------------------
# LGNNCore projections + half-ReLU (row-tiled, megacore-parallel).
# Per-chunk dot accumulation against the stacked weight tensor -- no concat.
# ---------------------------------------------------------------------------
def core_project_kernel(fa_ref, deg_ref, z_ref, pb0_ref, pb1_ref,
                        w_ref, b_ref, mask_ref, o_ref, *, radius):
    f32 = jnp.float32
    fa = fa_ref[...]                                       # (tm, F) bf16
    dfa = (deg_ref[...] * fa.astype(f32)).astype(jnp.bfloat16)
    res = jnp.dot(fa, w_ref[0], preferred_element_type=f32)           # linear_prev
    res = res + jnp.dot(dfa, w_ref[1], preferred_element_type=f32)    # linear_deg
    for k in range(radius):                                            # linear_radius
        res = res + jnp.dot(z_ref[k], w_ref[2 + k], preferred_element_type=f32)
    res = res + jnp.dot(pb0_ref[...], w_ref[radius + 2], preferred_element_type=f32)
    res = res + jnp.dot(pb1_ref[...], w_ref[radius + 3], preferred_element_type=f32)
    res = res + b_ref[...]                                  # sum of all biases
    # result = cat([res[:, :half], relu(res[:, half:])]) via static column mask.
    o_ref[...] = jnp.where(mask_ref[...] > 0.5, jnp.maximum(res, 0.0), res)


# BatchNorm apply (+ optional fused final classifier), row-tiled.
def bn_apply_kernel(*refs, final):
    if final:
        x_ref, scale_ref, shift_ref, rmask_ref, wlin_ref, blin_ref, o_ref = refs
    else:
        x_ref, scale_ref, shift_ref, rmask_ref, o_ref = refs
    h = (x_ref[...] * scale_ref[...] + shift_ref[...]) * rmask_ref[...]
    if final:  # fused final classifier linear (last g-layer only)
        h = jnp.dot(h.astype(jnp.bfloat16), wlin_ref[...],
                    preferred_element_type=jnp.float32) + blin_ref[...]
    o_ref[...] = h.astype(o_ref.dtype)


def lgnn_core_apply(A_i8, fa_bf, fb_bf, deg, P_stack_i8, rowmask, n_real,
                    prep, radius, final_w=None, final_b=None, eps=1e-5):
    S = fa_bf.shape[0]
    tm = min(TM_CORE, S)
    final = final_w is not None

    # 1) aggregate_radius (A resident in VMEM when it fits).
    z_all = aggregate_hops(A_i8, fa_bf, radius)            # (radius, S, F) bf16

    # 2) fuse inputs: single streamed matmul against stacked [P0; P1].
    pb = stream_matmul(P_stack_i8, fb_bf)                  # (2S, F) bf16
    pb0, pb1 = pb[:S], pb[S:]

    # 3) fused projections + half-ReLU, row-tiled ("parallel" -> megacore).
    proj_in = [fa_bf, deg, z_all, pb0, pb1,
               prep["w_stack"], prep["b_sum"], prep["mask"]]
    proj_specs = [
        pl.BlockSpec((tm, FPAD), lambda i: (i, 0)),
        pl.BlockSpec((tm, 1), lambda i: (i, 0)),
        pl.BlockSpec((radius, tm, FPAD), lambda i: (0, i, 0)),
        pl.BlockSpec((tm, FPAD), lambda i: (i, 0)),
        pl.BlockSpec((tm, FPAD), lambda i: (i, 0)),
        pl.BlockSpec((radius + 4, FPAD, FPAD), lambda i: (0, 0, 0)),
        pl.BlockSpec((1, FPAD), lambda i: (0, 0)),
        pl.BlockSpec((1, FPAD), lambda i: (0, 0)),
    ]
    prebn = pl.pallas_call(
        functools.partial(core_project_kernel, radius=radius),
        out_shape=jax.ShapeDtypeStruct((S, FPAD), jnp.float32),
        grid=(S // tm,),
        in_specs=proj_specs,
        out_specs=pl.BlockSpec((tm, FPAD), lambda i: (i, 0)),
        compiler_params=pltpu.CompilerParams(
            dimension_semantics=("parallel",),
            vmem_limit_bytes=_VMEM_LIMIT),
    )(*proj_in)

    # 4) BatchNorm1d batch statistics over the real (un-padded) rows, one pass
    #    (mean / mean-of-squares), folded with gamma/beta into scale/shift.
    # TODO(synk): training-mode batch statistics only (no running-stats eval path).
    valid = prebn[:n_real]
    mean = jnp.mean(valid, axis=0, keepdims=True)
    var = jnp.maximum(jnp.mean(valid * valid, axis=0, keepdims=True) - mean * mean, 0.0)
    scale = prep["gamma"] * jax.lax.rsqrt(var + eps)
    shift = prep["beta"] - mean * scale

    # 5) normalize (+ fused classifier on the final layer), row-tiled;
    #    non-final layers emit bf16 directly for the next layer.
    bn_in = [prebn, scale, shift, rowmask]
    bn_specs = [
        pl.BlockSpec((tm, FPAD), lambda i: (i, 0)),
        pl.BlockSpec((1, FPAD), lambda i: (0, 0)),
        pl.BlockSpec((1, FPAD), lambda i: (0, 0)),
        pl.BlockSpec((tm, 1), lambda i: (i, 0)),
    ]
    if final:
        bn_in += [final_w, final_b]
        bn_specs += [pl.BlockSpec((FPAD, FPAD), lambda i: (0, 0)),
                     pl.BlockSpec((1, FPAD), lambda i: (0, 0))]
    out_dtype = jnp.float32 if final else jnp.bfloat16
    return pl.pallas_call(
        functools.partial(bn_apply_kernel, final=final),
        out_shape=jax.ShapeDtypeStruct((S, FPAD), out_dtype),
        grid=(S // tm,),
        in_specs=bn_specs,
        out_specs=pl.BlockSpec((tm, FPAD), lambda i: (i, 0)),
        compiler_params=pltpu.CompilerParams(
            dimension_semantics=("parallel",),
            vmem_limit_bytes=_VMEM_LIMIT),
    )(*bn_in)


# ---------------------------------------------------------------------------
# Parameter construction (raw params -> padded / stacked / bf16 artifacts).
# ---------------------------------------------------------------------------
def init_core_params(key, fin, fout, radius):
    ks = jax.random.split(key, 4)
    s = 0.1
    return dict(
        wp=jax.random.normal(ks[0], (fin, fout), jnp.float32) * s,
        bp=jnp.zeros((1, fout), jnp.float32),
        wd=jax.random.normal(ks[1], (fin, fout), jnp.float32) * s,
        bd=jnp.zeros((1, fout), jnp.float32),
        wr=jax.random.normal(ks[2], (radius, fin, fout), jnp.float32) * s,
        br=jnp.zeros((radius, 1, fout), jnp.float32),
        wf=jax.random.normal(ks[3], (2 * fin, fout), jnp.float32) * s,
        bf=jnp.zeros((1, fout), jnp.float32),
        gamma=jnp.ones((1, fout), jnp.float32),
        beta=jnp.zeros((1, fout), jnp.float32),
    )


def prepare_core_params(p, fin, fout, radius):
    # Chunk order [fa | deg*fa | z_0..z_{r-1} | P0@fb | P1@fb]; each weight
    # block zero-padded to (128, 128).  Zero pads keep pad lanes exactly 0.
    blocks = [p["wp"], p["wd"]] + [p["wr"][i] for i in range(radius)] \
             + [p["wf"][:fin], p["wf"][fin:]]
    w_stack = jnp.stack([_pad2(b, FPAD, FPAD) for b in blocks], axis=0)
    b_sum = p["bp"] + p["bd"] + jnp.sum(p["br"], axis=0) + p["bf"]
    half = fout // 2
    mask = (jnp.arange(FPAD) >= half).astype(jnp.float32).reshape(1, FPAD)
    return dict(
        w_stack=w_stack.astype(jnp.bfloat16),
        b_sum=_pad2(b_sum, 1, FPAD),
        mask=mask,
        gamma=_pad2(p["gamma"], 1, FPAD),   # zero padding keeps pad cols == 0
        beta=_pad2(p["beta"], 1, FPAD),
    )


def init_lgnn_params(key, n_features, n_layers, radius, n_classes):
    feats = [1] + [n_features] * n_layers + [n_classes]
    layers = []
    for fin, fout in zip(feats[:-1], feats[1:]):
        key, kg, kl = jax.random.split(key, 3)
        layers.append(dict(
            g=prepare_core_params(init_core_params(kg, fin, fout, radius),
                                  fin, fout, radius),
            lg=prepare_core_params(init_core_params(kl, fin, fout, radius),
                                   fin, fout, radius)))
    key, kw = jax.random.split(key)
    lin_w = jax.random.normal(kw, (n_classes, n_classes), jnp.float32) * 0.1
    lin_b = jnp.zeros((1, n_classes), jnp.float32)
    return dict(
        layers=layers,
        lin_w=_pad2(lin_w, FPAD, FPAD).astype(jnp.bfloat16),
        lin_b=_pad2(lin_b, 1, FPAD),
        n_classes=n_classes,
    )


# ---------------------------------------------------------------------------
# Full LGNN forward (plain-JAX glue around the kernels).
# ---------------------------------------------------------------------------
def lgnn_forward(A_g, A_lg, pm_pd, params, radius):
    N, M = A_g.shape[0], A_lg.shape[0]
    Ng, Nlg = _pad_rows(N), _pad_rows(M)

    deg_g = _pad2(jnp.sum(A_g, axis=1, keepdims=True), Ng, 1)     # in_degrees()
    deg_lg = _pad2(jnp.sum(A_lg, axis=1, keepdims=True), Nlg, 1)

    # 0/1 aggregation matrices stored as int8; zero pad rows/cols never leak
    # into real rows (pad columns of A / P are exactly 0).
    A_g_i8 = _pad2(A_g, Ng, Ng).astype(jnp.int8)
    A_lg_i8 = _pad2(A_lg, Nlg, Nlg).astype(jnp.int8)

    P0 = _pad2(pm_pd[:, :, 0], Ng, Nlg)
    P1 = _pad2(pm_pd[:, :, 1], Ng, Nlg)
    P_g = jnp.concatenate([P0, P1], axis=0).astype(jnp.int8)       # (2Ng, Nlg)
    P_lg = jnp.concatenate([P0.T, P1.T], axis=0).astype(jnp.int8)  # (2Nlg, Ng)

    rmask_g = (jnp.arange(Ng) < N).astype(jnp.float32).reshape(Ng, 1)
    rmask_lg = (jnp.arange(Nlg) < M).astype(jnp.float32).reshape(Nlg, 1)

    # Initial features = degrees, padded to 128 lanes, bf16 between layers.
    x = _pad2(deg_g, Ng, FPAD).astype(jnp.bfloat16)
    y = _pad2(deg_lg, Nlg, FPAD).astype(jnp.bfloat16)

    n_layers = len(params["layers"])
    for li, lp in enumerate(params["layers"]):
        last = li == n_layers - 1
        nx = lgnn_core_apply(
            A_g_i8, x, y, deg_g, P_g, rmask_g, N, lp["g"], radius,
            final_w=params["lin_w"] if last else None,
            final_b=params["lin_b"] if last else None)
        if last:
            x = nx          # final-layer lg-core output is discarded by the model
        else:
            ny = lgnn_core_apply(A_lg_i8, y, x, deg_lg, P_lg, rmask_lg, M,
                                 lp["lg"], radius)
            x, y = nx, ny
    return x[:N, :params["n_classes"]]


if __name__ == "__main__":
    # Small synthetic problem: N graph nodes, M line-graph nodes (edges).
    N, M = 16, 24
    n_features, n_layers, radius, n_classes = 8, 2, 2, 4

    key = jax.random.PRNGKey(0)
    k_ag, k_alg, k_pm, k_par = jax.random.split(key, 4)

    # Dense symmetric adjacency matrices (no self loops).
    A_g = (jax.random.uniform(k_ag, (N, N)) < 0.3).astype(jnp.float32)
    A_g = jnp.maximum(A_g, A_g.T) * (1.0 - jnp.eye(N, dtype=jnp.float32))

    A_lg = (jax.random.uniform(k_alg, (M, M)) < 0.25).astype(jnp.float32)
    A_lg = jnp.maximum(A_lg, A_lg.T) * (1.0 - jnp.eye(M, dtype=jnp.float32))

    # Incidence-like pm_pd tensor (N, M, 2).
    # TODO(synk): A_lg / pm_pd are synthetic stand-ins; they are not derived
    # from the actual line-graph construction of A_g (shape semantics match).
    pm_pd = (jax.random.uniform(k_pm, (N, M, 2)) < 0.2).astype(jnp.float32)

    params = init_lgnn_params(k_par, n_features, n_layers, radius, n_classes)

    out = lgnn_forward(A_g, A_lg, pm_pd, params, radius)
    out = jax.block_until_ready(out)
    assert out.shape == (N, n_classes), out.shape
    assert bool(jnp.all(jnp.isfinite(out)))
    print("KERNEL_OK")
</pallas_src>

<mosaic_0001>
module attributes {stable_mosaic.version = 11 : i64} {
  func.func @hops_resident_kernel(%arg0: i32, %arg1: memref<32x32xi8, #tpu.memory_space<vmem>>, %arg2: memref<32x128xbf16, #tpu.memory_space<vmem>>, %arg3: memref<2x32x128xbf16, #tpu.memory_space<vmem>>) attributes {dimension_semantics = [#tpu.dimension_semantics<arbitrary>], iteration_bounds = array<i64: 1>, scalar_prefetch = 0 : i64, scratch_operands = 0 : i64, tpu.core_type = #tpu.core_type<tc>, window_params = [{pipeline_mode = #tpu.pipeline_mode<synchronous>, transform_indices = @transform_0, window_bounds = array<i64: 32, 32>}, {pipeline_mode = #tpu.pipeline_mode<synchronous>, transform_indices = @transform_1, window_bounds = array<i64: 32, 128>}, {pipeline_mode = #tpu.pipeline_mode<synchronous>, transform_indices = @transform_2, window_bounds = array<i64: 2, 32, 128>}]} {
    %c0 = arith.constant 0 : index
    %c0_0 = arith.constant 0 : index
    %0 = vector.load %arg1[%c0, %c0_0] : memref<32x32xi8, #tpu.memory_space<vmem>>, vector<32x32xi8>
    %1 = arith.sitofp %0 : vector<32x32xi8> to vector<32x32xbf16>
    %c0_1 = arith.constant 0 : index
    %c0_2 = arith.constant 0 : index
    %2 = vector.load %arg2[%c0_1, %c0_2] : memref<32x128xbf16, #tpu.memory_space<vmem>>, vector<32x128xbf16>
    %cst = arith.constant dense<0.000000e+00> : vector<32x128xf32>
    %3 = tpu.matmul %1, %2, %cst {dimension_numbers = #tpu.dot_dimension_numbers<[1], [0], [0], [1], [0, 0, 1, 1], [], []>} : vector<32x32xbf16>, vector<32x128xbf16>, vector<32x128xf32> -> vector<32x128xf32>
    %4 = arith.truncf %3 : vector<32x128xf32> to vector<32x128xbf16>
    %c0_3 = arith.constant 0 : index
    %c0_4 = arith.constant 0 : index
    %c0_5 = arith.constant 0 : index
    %5 = vector.load %arg3[%c0_3, %c0_4, %c0_5] : memref<2x32x128xbf16, #tpu.memory_space<vmem>>, vector<1x32x128xbf16>
    %6 = vector.shape_cast %5 : vector<1x32x128xbf16> to vector<32x128xbf16>
    %7 = vector.shape_cast %4 : vector<32x128xbf16> to vector<1x32x128xbf16>
    tpu.vector_store %arg3[%c0_3, %c0_4, %c0_5], %7 {strides = array<i32>} : memref<2x32x128xbf16, #tpu.memory_space<vmem>>, vector<1x32x128xbf16>,
    %cst_6 = arith.constant dense<0.000000e+00> : vector<32x128xf32>
    %8 = tpu.matmul %1, %4, %cst_6 {dimension_numbers = #tpu.dot_dimension_numbers<[1], [0], [0], [1], [0, 0, 1, 1], [], []>} : vector<32x32xbf16>, vector<32x128xbf16>, vector<32x128xf32> -> vector<32x128xf32>
    %9 = arith.truncf %8 : vector<32x128xf32> to vector<32x128xbf16>
    %c1 = arith.constant 1 : index
    %c0_7 = arith.constant 0 : index
    %c0_8 = arith.constant 0 : index
    %10 = vector.load %arg3[%c1, %c0_7, %c0_8] : memref<2x32x128xbf16, #tpu.memory_space<vmem>>, vector<1x32x128xbf16>
    %11 = vector.shape_cast %10 : vector<1x32x128xbf16> to vector<32x128xbf16>
    %12 = vector.shape_cast %9 : vector<32x128xbf16> to vector<1x32x128xbf16>
    tpu.vector_store %arg3[%c1, %c0_7, %c0_8], %12 {strides = array<i32>} : memref<2x32x128xbf16, #tpu.memory_space<vmem>>, vector<1x32x128xbf16>,
    return
  }
  func.func @transform_0(%arg0: i32) -> (i32, i32) {
    %c0_i32 = arith.constant 0 : i32
    %c0_i32_0 = arith.constant 0 : i32
    %c0_i32_1 = arith.constant 0 : i32
    return %c0_i32, %c0_i32_0 : i32, i32
  }
  func.func @transform_1(%arg0: i32) -> (i32, i32) {
    %c0_i32 = arith.constant 0 : i32
    %c0_i32_0 = arith.constant 0 : i32
    %c0_i32_1 = arith.constant 0 : i32
    return %c0_i32, %c0_i32_0 : i32, i32
  }
  func.func @transform_2(%arg0: i32) -> (i32, i32, i32) {
    %c0_i32 = arith.constant 0 : i32
    %c0_i32_0 = arith.constant 0 : i32
    %c0_i32_1 = arith.constant 0 : i32
    %c0_i32_2 = arith.constant 0 : i32
    return %c0_i32, %c0_i32_0, %c0_i32_1 : i32, i32, i32
  }
}

</mosaic_0001>

<llo_original>
// kernel: tpu_custom_call.1
$region0: #{tpu_custom_call.1}
  #allocation0 [shape = 'u32[]', space=smem, size = 0x4, offset = 0x4, fixed_abs, tag = 'smem constant byte address 0x4 - core index']
  #allocation1 [shape = 'u32[144,128]{1,0:T(1,128)}', space=vmem, size = 0x12000, scoped, tag = 'internal scratch']
  %s0 = inlined_call_operand.hbm [shape: s8[32,32], index: 0, kind: input, shape index: {}]
  %s1 = inlined_call_operand.hbm [shape: bf16[32,128], index: 1, kind: input, shape index: {}]
  %s2 = inlined_call_operand.hbm [shape: bf16[2,32,128], index: 2, kind: output, shape index: {}]
  %s3 = sld [smem:[#allocation0]]
  $region26: #{tpu_custom_call.1} parent=0
    _
  %s5 = ssub.s32 1, %s3
  %s6 = scalar_select 0, %s5, %s3
  $region1: #{tpu_custom_call.1} parent=0
    #allocation2 [shape = 'u8[4096]{0}', space=vmem, size = 0x1000, scoped, tag = 'input window, operand 0, single buffered']
    #allocation3 [shape = 's32[1]{0}', space=sflag, size = 0x4, scoped, tag = 'scoped memory for tpu_custom_call.1']
    #allocation4 [shape = 's32[1]{0}', space=sflag, size = 0x4, scoped, tag = 'scoped memory for tpu_custom_call.1']
    #allocation5 [shape = 'u8[8192]{0}', space=vmem, size = 0x2000, scoped, tag = 'input window, operand 1, single buffered']
    #allocation6 [shape = 's32[1]{0}', space=sflag, size = 0x4, scoped, tag = 'scoped memory for tpu_custom_call.1']
    #allocation7 [shape = 'u8[16384]{0}', space=vmem, size = 0x4000, scoped, tag = 'output window, operand 0, single buffered']
    %7 = vsyncpa [#allocation3], 0
    %8 = vsyncpa [#allocation6], 0
    %9 = vsyncpa [#allocation4], 0
    // Predicated region
    $region2: #{tpu_custom_call.1} parent=1 // pred_check
      _
    $region3: #{tpu_custom_call.1} parent=1 // pred_check_branch
      %11 = sbr.rel (0) target = $region5
    $region4: #{tpu_custom_call.1} parent=1 // pred_region
      %s13 = ssub.s32 128, 128
      %14 = vsyncadd [#allocation3], %s13
      %s16 = sshll.u32 [#allocation2], 4
      %s17 = int_to_ptr.vmem [resolvable:$true] %s16
      %19 = dma.hbm_to_vmem [thread:$0]  %s0, 128, %s17, [#allocation3]
    $region5: #{tpu_custom_call.1} parent=1 // pred_fallthru
      _
    // Predicated region
    $region6: #{tpu_custom_call.1} parent=1 // pred_check
      _
    $region7: #{tpu_custom_call.1} parent=1 // pred_check_branch
      %21 = sbr.rel (0) target = $region9
    $region8: #{tpu_custom_call.1} parent=1 // pred_region
      %s23 = ssub.s32 256, 256
      %24 = vsyncadd [#allocation6], %s23
      %s25 = sshll.u32 [#allocation5], 4
      %s26 = int_to_ptr.vmem [resolvable:$true] %s25
      %31 = dma.hbm_to_vmem [thread:$0]  %s1, 256, %s26, [#allocation6], 64, 64, 4
    $region9: #{tpu_custom_call.1} parent=1 // pred_fallthru
      _
    // Predicated region
    $region10: #{tpu_custom_call.1} parent=1 // pred_check
      _
    $region11: #{tpu_custom_call.1} parent=1 // pred_check_branch
      %33 = sbr.rel (0) target = $region13
    $region12: #{tpu_custom_call.1} parent=1 // pred_region
      %34 = dma.done [#allocation3], 128
    $region13: #{tpu_custom_call.1} parent=1 // pred_fallthru
      _
    // Predicated region
    $region14: #{tpu_custom_call.1} parent=1 // pred_check
      _
    $region15: #{tpu_custom_call.1} parent=1 // pred_check_branch
      %36 = sbr.rel (0) target = $region17
    $region16: #{tpu_custom_call.1} parent=1 // pred_region
      %37 = dma.done [#allocation6], 256
    $region17: #{tpu_custom_call.1} parent=1 // pred_fallthru
      _
    %v39 = vld [vmem:[#allocation2] sm:$0xff]
    %v40 = vunpack.c.l.s8.bf16 %v39
    %v41 = vunpack.c.h.s8.bf16 %v39
    %v42 = vld [vmem:[#allocation5] sm:$0xf]
    %v43 = vld [vmem:[#allocation5 + $0x4] sm:$0xf]
    %v44 = vld [vmem:[#allocation5 + $0x8] sm:$0xf]
    %v45 = vld [vmem:[#allocation5 + $0xc] sm:$0xf]
    %v50 = vunpack.c.l.b16 %v42
    %v51 = vunpack.c.l.b16 %v43
    %v52 = vunpack.c.l.b16 %v44
    %v53 = vunpack.c.l.b16 %v45
    %v54 = vpack.c.b16 %v51, %v50
    %v55 = vpack.c.b16 %v53, %v52
    %vm58 = vcmask 261120
    %v60 = vsel %vm58, %v40, 0
    %v63 = vsel %vm58, %v41, 0
    %65 = vmatprep.subr.bf16.mxu0 0
    %66 = vmatpush1.bf16.msra.mxu0 %v54
    %67 = vmatprep.subr.bf16.mxu0 0
    %68 = vmatpush1.bf16.msra.mxu0 %v55
    %69 = vmatprep.subr.bf16.mxu0 0
    %70 = vmatpush1.bf16.msra.mxu0 0
    %71 = vmatprep.subr.bf16.mxu0 0
    %72 = vmatpush1.bf16.msra.mxu0 0
    %73 = vmatprep.subr.bf16.mxu0 0
    %74 = vmatpush1.bf16.msra.mxu0 0
    %75 = vmatprep.subr.bf16.mxu0 0
    %76 = vmatpush1.bf16.msra.mxu0 0
    %77 = vmatprep.subr.bf16.mxu0 0
    %78 = vmatpush1.bf16.msra.mxu0 0
    %79 = vmatprep.subr.bf16.mxu0 0
    %80 = vmatpush1.bf16.msra.mxu0 0
    %81 = vmatprep.subr.bf16.mxu0 0
    %82 = vmatpush1.bf16.msra.mxu0 0
    %83 = vmatprep.subr.bf16.mxu0 0
    %84 = vmatpush1.bf16.msra.mxu0 0
    %85 = vmatprep.subr.bf16.mxu0 0
    %86 = vmatpush1.bf16.msra.mxu0 0
    %87 = vmatprep.subr.bf16.mxu0 0
    %88 = vmatpush1.bf16.msra.mxu0 0
    %89 = vmatprep.subr.bf16.mxu0 0
    %90 = vmatpush1.bf16.msra.mxu0 0
    %91 = vmatprep.subr.bf16.mxu0 0
    %92 = vmatpush1.bf16.msra.mxu0 0
    %93 = vmatprep.subr.bf16.mxu0 0
    %94 = vmatpush1.bf16.msra.mxu0 0
    %95 = vmatprep.subr.bf16.mxu0 0
    %96 = vmatpush1.bf16.msra.mxu0 0
    %97 = vmatprep.mubr.bf16.mxu0 0
    %98 = vmatmul.mubr.bf16.gmra.mrb[0].mxu0 %v60
    %v99 = vpop.f32.mrb[0].mxu0
    %v100 = vadd.f32 0.0, %v99
    %v101 = vpop.f32.mrb[0].mxu0
    %v102 = vpop.f32.mrb[0].mxu0
    %v103 = vadd.f32 0.0, %v102
    %v104 = vpop.f32.mrb[0].mxu0
    %105 = vmatprep.mubr.bf16.mxu0 0
    %106 = vmatmul.mubr.bf16.gmra.mrb[0].mxu0 %v63
    %v107 = vpop.f32.mrb[0].mxu0
    %v108 = vadd.f32 0.0, %v107
    %v109 = vpop.f32.mrb[0].mxu0
    %v110 = vpop.f32.mrb[0].mxu0
    %v111 = vadd.f32 0.0, %v110
    %v112 = vpop.f32.mrb[0].mxu0
    %113 = vdwg.mxu0
    %v114 = vpack.c.bf16 %v103, %v100
    %v115 = vpack.c.bf16 %v111, %v108
    %v118 = vunpack.c.l.b16 %v114
    %v119 = vunpack.c.h.b16 %v114
    %v120 = vunpack.c.l.b16 %v115
    %v121 = vunpack.c.h.b16 %v115
    %v122 = vpack.c.b16 %v118, %v118
    %v123 = vpack.c.b16 %v119, %v119
    %v124 = vpack.c.b16 %v120, %v120
    %v125 = vpack.c.b16 %v121, %v121
    %130 = vst [vmem:[#allocation7] sm:$0xf] %v122
    %131 = vst [vmem:[#allocation7 + $0x4] sm:$0xf] %v123
    %132 = vst [vmem:[#allocation7 + $0x8] sm:$0xf] %v124
    %133 = vst [vmem:[#allocation7 + $0xc] sm:$0xf] %v125
    %134 = vmatprep.subr.bf16.mxu0 0
    %135 = vmatpush1.bf16.msra.mxu0 %v114
    %136 = vmatprep.subr.bf16.mxu0 0
    %137 = vmatpush1.bf16.msra.mxu0 %v115
    %138 = vmatprep.subr.bf16.mxu0 0
    %139 = vmatpush1.bf16.msra.mxu0 0
    %140 = vmatprep.subr.bf16.mxu0 0
    %141 = vmatpush1.bf16.msra.mxu0 0
    %142 = vmatprep.subr.bf16.mxu0 0
    %143 = vmatpush1.bf16.msra.mxu0 0
    %144 = vmatprep.subr.bf16.mxu0 0
    %145 = vmatpush1.bf16.msra.mxu0 0
    %146 = vmatprep.subr.bf16.mxu0 0
    %147 = vmatpush1.bf16.msra.mxu0 0
    %148 = vmatprep.subr.bf16.mxu0 0
    %149 = vmatpush1.bf16.msra.mxu0 0
    %150 = vmatprep.subr.bf16.mxu0 0
    %151 = vmatpush1.bf16.msra.mxu0 0
    %152 = vmatprep.subr.bf16.mxu0 0
    %153 = vmatpush1.bf16.msra.mxu0 0
    %154 = vmatprep.subr.bf16.mxu0 0
    %155 = vmatpush1.bf16.msra.mxu0 0
    %156 = vmatprep.subr.bf16.mxu0 0
    %157 = vmatpush1.bf16.msra.mxu0 0
    %158 = vmatprep.subr.bf16.mxu0 0
    %159 = vmatpush1.bf16.msra.mxu0 0
    %160 = vmatprep.subr.bf16.mxu0 0
    %161 = vmatpush1.bf16.msra.mxu0 0
    %162 = vmatprep.subr.bf16.mxu0 0
    %163 = vmatpush1.bf16.msra.mxu0 0
    %164 = vmatprep.subr.bf16.mxu0 0
    %165 = vmatpush1.bf16.msra.mxu0 0
    %166 = vmatprep.mubr.bf16.mxu0 0
    %167 = vmatmul.mubr.bf16.gmra.mrb[0].mxu0 %v60
    %v168 = vpop.f32.mrb[0].mxu0
    %v169 = vadd.f32 0.0, %v168
    %v170 = vpop.f32.mrb[0].mxu0
    %v171 = vpop.f32.mrb[0].mxu0
    %v172 = vadd.f32 0.0, %v171
    %v173 = vpop.f32.mrb[0].mxu0
    %174 = vmatprep.mubr.bf16.mxu0 0
    %175 = vmatmul.mubr.bf16.gmra.mrb[0].mxu0 %v63
    %v176 = vpop.f32.mrb[0].mxu0
    %v177 = vadd.f32 0.0, %v176
    %v178 = vpop.f32.mrb[0].mxu0
    %v179 = vpop.f32.mrb[0].mxu0
    %v180 = vadd.f32 0.0, %v179
    %v181 = vpop.f32.mrb[0].mxu0
    %182 = vdwg.mxu0
    %v183 = vpack.c.bf16 %v172, %v169
    %v184 = vpack.c.bf16 %v180, %v177
    %v187 = vunpack.c.l.b16 %v183
    %v188 = vunpack.c.h.b16 %v183
    %v189 = vunpack.c.l.b16 %v184
    %v190 = vunpack.c.h.b16 %v184
    %v191 = vpack.c.b16 %v187, %v187
    %v192 = vpack.c.b16 %v188, %v188
    %v193 = vpack.c.b16 %v189, %v189
    %v194 = vpack.c.b16 %v190, %v190
    %s199 = scalar_lea.vmem [#allocation7], 16
    %200 = vst [vmem:[%s199] sm:$0xf] %v191
    %201 = vst [vmem:[%s199 + $0x4] sm:$0xf] %v192
    %202 = vst [vmem:[%s199 + $0x8] sm:$0xf] %v193
    %203 = vst [vmem:[%s199 + $0xc] sm:$0xf] %v194
    // Predicated region
    $region18: #{tpu_custom_call.1} parent=1 // pred_check
      _
    $region19: #{tpu_custom_call.1} parent=1 // pred_check_branch
      %205 = sbr.rel (0) target = $region21
    $region20: #{tpu_custom_call.1} parent=1 // pred_region
      %s207 = ssub.s32 512, 512
      %208 = vsyncadd [#allocation4], %s207
      %s209 = sshll.u32 [#allocation7], 4
      %s210 = int_to_ptr.vmem [resolvable:$true] %s209
      %215 = dma.vmem_to_hbm [thread:$0]  %s210, 512, %s2, [#allocation4], 64, 64, 4
    $region21: #{tpu_custom_call.1} parent=1 // pred_fallthru
      _
    // Predicated region
    $region22: #{tpu_custom_call.1} parent=1 // pred_check
      _
    $region23: #{tpu_custom_call.1} parent=1 // pred_check_branch
      %217 = sbr.rel (0) target = $region25
    $region24: #{tpu_custom_call.1} parent=1 // pred_region
      %218 = dma.done [#allocation4], 512
    $region25: #{tpu_custom_call.1} parent=1 // pred_fallthru
      _
    %219 = vsyncpa [#allocation3], 1
    %220 = vsyncpa [#allocation6], 1
    %221 = vsyncpa [#allocation4], 1

</llo_original>
